<compile_context>
chip_gen: v5e
topology: v5e:2x2
jax: 0.10.0
libtpu: 0.0.40
codegen_flags: <defaults>
</compile_context>

<pallas_src>
import jax
import jax.numpy as jnp
from jax import lax
from jax.experimental import pallas as pl
from jax.experimental.pallas import tpu as pltpu

NEG_SLOPE = 0.01   # nn.LeakyReLU default
NORM_EPS = 1e-12   # F.normalize default eps


def _round_up(v, m):
    return ((v + m - 1) // m) * m


def _leaky_relu(v):
    return jnp.where(v >= 0, v, NEG_SLOPE * v)


def _make_kernel(tk, x_resident):
    """Build the kernel body. `tk` / `x_resident` are trace-time constants."""

    def kernel(a_ref, xk_ref, xm_ref, w1_ref, b1_ref, w2_ref, b2_ref,
               o_ref, z_acc):
        k = pl.program_id(1)

        @pl.when(k == 0)
        def _():
            z_acc[...] = jnp.zeros_like(z_acc)

        if x_resident:
            # x (bf16) is fully resident in VMEM: slice the K tile in-kernel.
            start = pl.multiple_of(k * tk, tk)
            xk = xk_ref[pl.ds(start, tk), :]
        else:
            xk = xk_ref[...]

        # z[i-tile, :] += A[i-tile, k-tile] @ x[k-tile, :]
        # bf16 operands, f32 MXU accumulation.
        z_acc[...] += jnp.dot(a_ref[...], xk,
                              preferred_element_type=jnp.float32)

        @pl.when(k == pl.num_programs(1) - 1)
        def _():
            z = z_acc[...]
            x = xm_ref[...]

            # branch 1: LeakyReLU(Linear1(z + x))
            h = jnp.dot(z + x, w1_ref[...],
                        preferred_element_type=jnp.float32) + b1_ref[...]
            h = _leaky_relu(h)

            # branch 2: LeakyReLU(Linear2(z * x)), accumulated in place
            h2 = jnp.dot(z * x, w2_ref[...],
                         preferred_element_type=jnp.float32) + b2_ref[...]
            h = h + _leaky_relu(h2)

            # F.normalize(s, dim=-1) = s / max(||s||, eps)
            #                        = s * rsqrt(max(||s||^2, eps^2))
            inv = lax.rsqrt(jnp.maximum(
                jnp.sum(h * h, axis=-1, keepdims=True), NORM_EPS * NORM_EPS))
            o_ref[...] = (h * inv).astype(o_ref.dtype)

    return kernel


def ngcf_conv(x, A, w1, b1, w2, b2, *, tm=512, tk=2048,
              x_resident_max_bytes=4 * 1024 * 1024):
    """NGCFConv forward.

    Args:
      x:  [N, F_in]     float32 node features
      A:  [N, N]        float32 adjacency (e.g. normalized Laplacian)
      w1: [F_in, F_out] linear1 weight (already transposed vs nn.Linear)
      b1: [F_out]       linear1 bias
      w2: [F_in, F_out] linear2 weight (already transposed)
      b2: [F_out]       linear2 bias
      tm, tk: row / contraction tile sizes (clamped to the problem size).
      x_resident_max_bytes: budget for keeping bf16 x fully VMEM-resident.
    Returns:
      [N, F_out] float32, L2-normalized along the last axis.
    """
    n, f_in = x.shape
    f_out = w1.shape[1]

    # Lane-dense feature padding (multiples of 128).
    f_in_p = _round_up(f_in, 128)
    f_out_p = _round_up(f_out, 128)

    # Clamp tiles to the (128-rounded) problem size and keep tm | tk so a
    # single row padding works for both grid axes.
    n128 = _round_up(n, 128)
    tm = _round_up(max(128, min(tm, n128)), 128)
    tk = max(tm, (min(tk, n128) // tm) * tm)
    n_p = _round_up(n, tk)

    # v7x shards the "parallel" row axis across 2 TensorCores: make sure there
    # are at least two row tiles whenever the padded problem allows it.
    if n_p // tm < 2 and n_p >= 256 and (n_p // 2) % 128 == 0:
        tm = n_p // 2

    f32 = jnp.float32
    bf16 = jnp.bfloat16

    # bf16 cast fused into the pad of A (half-byte copy); everything else f32.
    A_p = jnp.pad(A.astype(bf16), ((0, n_p - n), (0, n_p - n)))
    x_k = jnp.pad(x.astype(bf16), ((0, n_p - n), (0, f_in_p - f_in)))
    x_m = jnp.pad(x.astype(f32), ((0, n_p - n), (0, f_in_p - f_in)))
    w1_p = jnp.pad(w1.astype(f32), ((0, f_in_p - f_in), (0, f_out_p - f_out)))
    w2_p = jnp.pad(w2.astype(f32), ((0, f_in_p - f_in), (0, f_out_p - f_out)))
    b1_p = jnp.pad(b1.astype(f32), (0, f_out_p - f_out)).reshape(1, f_out_p)
    b2_p = jnp.pad(b2.astype(f32), (0, f_out_p - f_out)).reshape(1, f_out_p)

    # Keep x resident in VMEM (one DMA total) when it is small enough,
    # otherwise stream the (tk, F_in) tile per K step.
    x_resident = (n_p * f_in_p * 2) <= x_resident_max_bytes
    if x_resident:
        xk_spec = pl.BlockSpec((n_p, f_in_p), lambda i, k: (0, 0))
    else:
        xk_spec = pl.BlockSpec((tk, f_in_p), lambda i, k: (k, 0))

    grid = (n_p // tm, n_p // tk)

    flops = 2 * n * n * f_in + 4 * n * f_in * f_out
    x_reads = 1 if x_resident else (n_p // tm)
    bytes_accessed = (2 * n_p * n_p                       # A (bf16, once)
                      + 2 * n_p * f_in_p * x_reads        # x_k (bf16)
                      + 4 * n_p * f_in_p                  # x_m (f32)
                      + 4 * n_p * f_out_p                 # out (f32)
                      + 2 * 4 * f_in_p * f_out_p)         # weights

    out_p = pl.pallas_call(
        _make_kernel(tk, x_resident),
        out_shape=jax.ShapeDtypeStruct((n_p, f_out_p), f32),
        grid_spec=pltpu.PrefetchScalarGridSpec(
            num_scalar_prefetch=0,
            grid=grid,
            in_specs=[
                pl.BlockSpec((tm, tk), lambda i, k: (i, k)),            # A tile (bf16, streamed)
                xk_spec,                                                # x (bf16, contraction)
                pl.BlockSpec((tm, f_in_p), lambda i, k: (i, 0)),        # x (f32, epilogue)
                pl.BlockSpec((f_in_p, f_out_p), lambda i, k: (0, 0)),   # w1 (resident)
                pl.BlockSpec((1, f_out_p), lambda i, k: (0, 0)),        # b1 (resident)
                pl.BlockSpec((f_in_p, f_out_p), lambda i, k: (0, 0)),   # w2 (resident)
                pl.BlockSpec((1, f_out_p), lambda i, k: (0, 0)),        # b2 (resident)
            ],
            out_specs=pl.BlockSpec((tm, f_out_p), lambda i, k: (i, 0)),
            scratch_shapes=[pltpu.VMEM((tm, f_in_p), f32)],             # z accumulator
        ),
        compiler_params=pltpu.CompilerParams(
            dimension_semantics=("parallel", "arbitrary"),
            # Above v5e's 16 MiB / v6e's 32 MiB scoped defaults, within v7x's
            # 64 MiB physical budget; actual usage at default tiles is ~12 MiB.
            vmem_limit_bytes=48 * 1024 * 1024,
        ),
        cost_estimate=pl.CostEstimate(
            flops=flops, transcendentals=n, bytes_accessed=bytes_accessed),
    )(A_p, x_k, x_m, w1_p, b1_p, w2_p, b2_p)

    return out_p[:n, :f_out]


if __name__ == "__main__":
    # Small, deterministic example: 128 nodes, 64 input features, 64 output.
    N, F_IN, F_OUT = 128, 64, 64
    key = jax.random.PRNGKey(0)
    kx, ka, kw1, kb1, kw2, kb2 = jax.random.split(key, 6)

    x = jax.random.normal(kx, (N, F_IN), dtype=jnp.float32)
    A = jax.random.uniform(ka, (N, N), dtype=jnp.float32) * 0.1

    # Deterministic init mimicking nn.Linear's uniform(-1/sqrt(in), 1/sqrt(in)).
    bound = 1.0 / (F_IN ** 0.5)
    w1 = jax.random.uniform(kw1, (F_IN, F_OUT), jnp.float32, -bound, bound)
    b1 = jax.random.uniform(kb1, (F_OUT,), jnp.float32, -bound, bound)
    w2 = jax.random.uniform(kw2, (F_IN, F_OUT), jnp.float32, -bound, bound)
    b2 = jax.random.uniform(kb2, (F_OUT,), jnp.float32, -bound, bound)

    out = jax.jit(ngcf_conv)(x, A, w1, b1, w2, b2)
    jax.block_until_ready(out)

    # Pure-JAX references.
    def epilogue(z):
        p1 = (z + x) @ w1 + b1
        p2 = (z * x) @ w2 + b2
        h1 = jnp.where(p1 >= 0, p1, NEG_SLOPE * p1)
        h2 = jnp.where(p2 >= 0, p2, NEG_SLOPE * p2)
        s = h1 + h2
        return s / jnp.maximum(jnp.linalg.norm(s, axis=-1, keepdims=True),
                               NORM_EPS)

    # (a) Reference with the same bf16 A@x input precision as the kernel
    #     (tight tolerance: isolates kernel correctness).
    z_bf16 = jnp.dot(A.astype(jnp.bfloat16), x.astype(jnp.bfloat16),
                     preferred_element_type=jnp.float32)
    ref_matched = epilogue(z_bf16)
    assert jnp.allclose(out, ref_matched, atol=2e-4, rtol=2e-4), \
        "mismatch vs bf16-matched reference"

    # (b) Full-f32 reference (exact PyTorch semantics); looser tolerance
    #     accounts for the bf16 inputs of the A@x matmul.
    ref_f32 = epilogue(A @ x)
    assert jnp.allclose(out, ref_f32, atol=2e-2, rtol=2e-2), \
        "mismatch vs f32 reference"

    print("KERNEL_OK")
</pallas_src>

<mosaic_0001>
module attributes {stable_mosaic.version = 11 : i64} {
  func.func @kernel(%arg0: i32, %arg1: i32, %arg2: memref<128x128xbf16, #tpu.memory_space<vmem>>, %arg3: memref<128x128xbf16, #tpu.memory_space<vmem>>, %arg4: memref<128x128xf32, #tpu.memory_space<vmem>>, %arg5: memref<128x128xf32, #tpu.memory_space<vmem>>, %arg6: memref<1x128xf32, #tpu.memory_space<vmem>>, %arg7: memref<128x128xf32, #tpu.memory_space<vmem>>, %arg8: memref<1x128xf32, #tpu.memory_space<vmem>>, %arg9: memref<128x128xf32, #tpu.memory_space<vmem>>, %arg10: memref<128x128xf32, #tpu.memory_space<vmem>>) attributes {dimension_semantics = [#tpu.dimension_semantics<parallel>, #tpu.dimension_semantics<arbitrary>], iteration_bounds = array<i64: 1, 1>, scalar_prefetch = 0 : i64, scratch_operands = 1 : i64, tpu.core_type = #tpu.core_type<tc>, window_params = [{transform_indices = @transform_0, window_bounds = array<i64: 128, 128>}, {pipeline_mode = #tpu.pipeline_mode<synchronous>, transform_indices = @transform_1, window_bounds = array<i64: 128, 128>}, {transform_indices = @transform_2, window_bounds = array<i64: 128, 128>}, {pipeline_mode = #tpu.pipeline_mode<synchronous>, transform_indices = @transform_3, window_bounds = array<i64: 128, 128>}, {pipeline_mode = #tpu.pipeline_mode<synchronous>, transform_indices = @transform_4, window_bounds = array<i64: 1, 128>}, {pipeline_mode = #tpu.pipeline_mode<synchronous>, transform_indices = @transform_5, window_bounds = array<i64: 128, 128>}, {pipeline_mode = #tpu.pipeline_mode<synchronous>, transform_indices = @transform_6, window_bounds = array<i64: 1, 128>}, {transform_indices = @transform_7, window_bounds = array<i64: 128, 128>}]} {
    %c0_i32 = arith.constant 0 : i32
    %0 = arith.cmpi eq, %arg1, %c0_i32 : i32
    %1 = arith.extui %0 : i1 to i32
    %c0_i32_0 = arith.constant 0 : i32
    %2 = arith.cmpi ne, %1, %c0_i32_0 : i32
    scf.if %2 {
      %cst_9 = arith.constant 0.000000e+00 : f32
      %15 = vector.broadcast %cst_9 : f32 to vector<128x128xf32>
      %c0_10 = arith.constant 0 : index
      %c0_11 = arith.constant 0 : index
      %16 = vector.load %arg10[%c0_10, %c0_11] : memref<128x128xf32, #tpu.memory_space<vmem>>, vector<128x128xf32>
      tpu.vector_store %arg10[%c0_10, %c0_11], %15 {strides = array<i32>} : memref<128x128xf32, #tpu.memory_space<vmem>>, vector<128x128xf32>,
    } else {
    }
    %c128_i32 = arith.constant 128 : i32
    %3 = arith.muli %arg1, %c128_i32 : i32
    %4 = tpu.assume_multiple %3, 128 : i32
    %5 = arith.index_cast %4 : i32 to index
    %c0 = arith.constant 0 : index
    %6 = vector.load %arg3[%5, %c0] : memref<128x128xbf16, #tpu.memory_space<vmem>>, vector<128x128xbf16>
    %c0_1 = arith.constant 0 : index
    %c0_2 = arith.constant 0 : index
    %7 = vector.load %arg10[%c0_1, %c0_2] : memref<128x128xf32, #tpu.memory_space<vmem>>, vector<128x128xf32>
    %c0_3 = arith.constant 0 : index
    %c0_4 = arith.constant 0 : index
    %8 = vector.load %arg2[%c0_3, %c0_4] : memref<128x128xbf16, #tpu.memory_space<vmem>>, vector<128x128xbf16>
    %cst = arith.constant dense<0.000000e+00> : vector<128x128xf32>
    %9 = tpu.matmul %8, %6, %cst {dimension_numbers = #tpu.dot_dimension_numbers<[1], [0], [0], [1], [0, 0, 1, 1], [], []>} : vector<128x128xbf16>, vector<128x128xbf16>, vector<128x128xf32> -> vector<128x128xf32>
    %10 = arith.addf %7, %9 : vector<128x128xf32>
    %c0_5 = arith.constant 0 : index
    %c0_6 = arith.constant 0 : index
    %11 = vector.load %arg10[%c0_5, %c0_6] : memref<128x128xf32, #tpu.memory_space<vmem>>, vector<128x128xf32>
    tpu.vector_store %arg10[%c0_5, %c0_6], %10 {strides = array<i32>} : memref<128x128xf32, #tpu.memory_space<vmem>>, vector<128x128xf32>,
    %c0_i32_7 = arith.constant 0 : i32
    %12 = arith.cmpi eq, %arg1, %c0_i32_7 : i32
    %13 = arith.extui %12 : i1 to i32
    %c0_i32_8 = arith.constant 0 : i32
    %14 = arith.cmpi ne, %13, %c0_i32_8 : i32
    scf.if %14 {
      %c0_9 = arith.constant 0 : index
      %c0_10 = arith.constant 0 : index
      %15 = vector.load %arg10[%c0_9, %c0_10] : memref<128x128xf32, #tpu.memory_space<vmem>>, vector<128x128xf32>
      %c0_11 = arith.constant 0 : index
      %c0_12 = arith.constant 0 : index
      %16 = vector.load %arg4[%c0_11, %c0_12] : memref<128x128xf32, #tpu.memory_space<vmem>>, vector<128x128xf32>
      %17 = arith.addf %15, %16 : vector<128x128xf32>
      %c0_13 = arith.constant 0 : index
      %c0_14 = arith.constant 0 : index
      %18 = vector.load %arg5[%c0_13, %c0_14] : memref<128x128xf32, #tpu.memory_space<vmem>>, vector<128x128xf32>
      %cst_15 = arith.constant dense<0.000000e+00> : vector<128x128xf32>
      %19 = tpu.matmul %17, %18, %cst_15 {dimension_numbers = #tpu.dot_dimension_numbers<[1], [0], [0], [1], [0, 0, 1, 1], [], []>} : vector<128x128xf32>, vector<128x128xf32>, vector<128x128xf32> -> vector<128x128xf32>
      %c0_16 = arith.constant 0 : index
      %c0_17 = arith.constant 0 : index
      %20 = vector.load %arg6[%c0_16, %c0_17] : memref<1x128xf32, #tpu.memory_space<vmem>>, vector<1x128xf32>
      %21 = vector.broadcast %20 : vector<1x128xf32> to vector<128x128xf32>
      %22 = arith.addf %19, %21 : vector<128x128xf32>
      %cst_18 = arith.constant 0.000000e+00 : f32
      %23 = vector.broadcast %cst_18 : f32 to vector<128x128xf32>
      %24 = arith.cmpf oge, %22, %23 : vector<128x128xf32>
      %cst_19 = arith.constant 0.00999999977 : f32
      %25 = vector.broadcast %cst_19 : f32 to vector<128x128xf32>
      %26 = arith.mulf %25, %22 : vector<128x128xf32>
      %27 = arith.select %24, %22, %26 : vector<128x128xi1>, vector<128x128xf32>
      %28 = arith.mulf %15, %16 : vector<128x128xf32>
      %c0_20 = arith.constant 0 : index
      %c0_21 = arith.constant 0 : index
      %29 = vector.load %arg7[%c0_20, %c0_21] : memref<128x128xf32, #tpu.memory_space<vmem>>, vector<128x128xf32>
      %cst_22 = arith.constant dense<0.000000e+00> : vector<128x128xf32>
      %30 = tpu.matmul %28, %29, %cst_22 {dimension_numbers = #tpu.dot_dimension_numbers<[1], [0], [0], [1], [0, 0, 1, 1], [], []>} : vector<128x128xf32>, vector<128x128xf32>, vector<128x128xf32> -> vector<128x128xf32>
      %c0_23 = arith.constant 0 : index
      %c0_24 = arith.constant 0 : index
      %31 = vector.load %arg8[%c0_23, %c0_24] : memref<1x128xf32, #tpu.memory_space<vmem>>, vector<1x128xf32>
      %32 = vector.broadcast %31 : vector<1x128xf32> to vector<128x128xf32>
      %33 = arith.addf %30, %32 : vector<128x128xf32>
      %cst_25 = arith.constant 0.000000e+00 : f32
      %34 = vector.broadcast %cst_25 : f32 to vector<128x128xf32>
      %35 = arith.cmpf oge, %33, %34 : vector<128x128xf32>
      %cst_26 = arith.constant 0.00999999977 : f32
      %36 = vector.broadcast %cst_26 : f32 to vector<128x128xf32>
      %37 = arith.mulf %36, %33 : vector<128x128xf32>
      %38 = arith.select %35, %33, %37 : vector<128x128xi1>, vector<128x128xf32>
      %39 = arith.addf %27, %38 : vector<128x128xf32>
      %40 = arith.mulf %39, %39 : vector<128x128xf32>
      %cst_27 = arith.constant dense<0.000000e+00> : vector<128xf32>
      %41 = vector.multi_reduction <add>, %40, %cst_27 [1] : vector<128x128xf32> to vector<128xf32>
      %42 = vector.shape_cast %41 : vector<128xf32> to vector<128x1xf32>
      %cst_28 = arith.constant 1.000000e-24 : f32
      %43 = vector.broadcast %cst_28 : f32 to vector<128x1xf32>
      %44 = arith.maximumf %42, %43 : vector<128x1xf32>
      %45 = math.rsqrt %44 : vector<128x1xf32>
      %46 = vector.broadcast %45 : vector<128x1xf32> to vector<128x128xf32>
      %47 = arith.mulf %39, %46 : vector<128x128xf32>
      %c0_29 = arith.constant 0 : index
      %c0_30 = arith.constant 0 : index
      %48 = vector.load %arg9[%c0_29, %c0_30] : memref<128x128xf32, #tpu.memory_space<vmem>>, vector<128x128xf32>
      tpu.vector_store %arg9[%c0_29, %c0_30], %47 {strides = array<i32>} : memref<128x128xf32, #tpu.memory_space<vmem>>, vector<128x128xf32>,
    } else {
    }
    return
  }
  func.func @transform_0(%arg0: i32, %arg1: i32) -> (i32, i32) {
    %c0_i32 = arith.constant 0 : i32
    return %arg0, %arg1 : i32, i32
  }
  func.func @transform_1(%arg0: i32, %arg1: i32) -> (i32, i32) {
    %c0_i32 = arith.constant 0 : i32
    %c0_i32_0 = arith.constant 0 : i32
    %c0_i32_1 = arith.constant 0 : i32
    return %c0_i32, %c0_i32_0 : i32, i32
  }
  func.func @transform_2(%arg0: i32, %arg1: i32) -> (i32, i32) {
    %c0_i32 = arith.constant 0 : i32
    %c0_i32_0 = arith.constant 0 : i32
    return %arg0, %c0_i32 : i32, i32
  }
  func.func @transform_3(%arg0: i32, %arg1: i32) -> (i32, i32) {
    %c0_i32 = arith.constant 0 : i32
    %c0_i32_0 = arith.constant 0 : i32
    %c0_i32_1 = arith.constant 0 : i32
    return %c0_i32, %c0_i32_0 : i32, i32
  }
  func.func @transform_4(%arg0: i32, %arg1: i32) -> (i32, i32) {
    %c0_i32 = arith.constant 0 : i32
    %c0_i32_0 = arith.constant 0 : i32
    %c0_i32_1 = arith.constant 0 : i32
    return %c0_i32, %c0_i32_0 : i32, i32
  }
  func.func @transform_5(%arg0: i32, %arg1: i32) -> (i32, i32) {
    %c0_i32 = arith.constant 0 : i32
    %c0_i32_0 = arith.constant 0 : i32
    %c0_i32_1 = arith.constant 0 : i32
    return %c0_i32, %c0_i32_0 : i32, i32
  }
  func.func @transform_6(%arg0: i32, %arg1: i32) -> (i32, i32) {
    %c0_i32 = arith.constant 0 : i32
    %c0_i32_0 = arith.constant 0 : i32
    %c0_i32_1 = arith.constant 0 : i32
    return %c0_i32, %c0_i32_0 : i32, i32
  }
  func.func @transform_7(%arg0: i32, %arg1: i32) -> (i32, i32) {
    %c0_i32 = arith.constant 0 : i32
    %c0_i32_0 = arith.constant 0 : i32
    return %arg0, %c0_i32 : i32, i32
  }
}

</mosaic_0001>

<llo_original>
// kernel: ngcf_conv.1
$region0: #{ngcf_conv.1}
  #allocation0 [shape = 'u32[]', space=smem, size = 0x4, offset = 0x4, fixed_abs, tag = 'smem constant byte address 0x4 - core index']
  #allocation1 [shape = 'u32[72,128]{1,0:T(1,128)}', space=vmem, size = 0x9000, scoped, tag = 'internal scratch']
  #allocation2 [shape = 'f32[128,128]{1,0:T(8,128)}', space=vmem, size = 0x10000, scoped, tag = 'scratch operand']
  %s0 = inlined_call_operand.vmem [shape: bf16[128,128], index: 0, kind: input, shape index: {}]
  %s1 = inlined_call_operand.vmem [shape: bf16[128,128], index: 1, kind: input, shape index: {}]
  %s2 = inlined_call_operand.vmem [shape: f32[128,128], index: 2, kind: input, shape index: {}]
  %s3 = inlined_call_operand.vmem [shape: f32[128,128], index: 3, kind: input, shape index: {}]
  %s4 = inlined_call_operand.vmem [shape: f32[1,128], index: 4, kind: input, shape index: {}]
  %s5 = inlined_call_operand.vmem [shape: f32[128,128], index: 5, kind: input, shape index: {}]
  %s6 = inlined_call_operand.vmem [shape: f32[1,128], index: 6, kind: input, shape index: {}]
  %s7 = inlined_call_operand.vmem [shape: f32[128,128], index: 7, kind: output, shape index: {}]
  %s8 = sld [smem:[#allocation0]]
  $region46: #{ngcf_conv.1} parent=0
    _
  %s10 = ssub.s32 1, %s8
  %s11 = scalar_select 0, %s10, %s8
  // Predicated region
  $region2: #{ngcf_conv.1} parent=0 // pred_check
    _
  $region3: #{ngcf_conv.1} parent=0 // pred_check_branch
    %13 = sbr.rel (0) target = $region5
  $region4: #{ngcf_conv.1} parent=0 // pred_region
    _
  $region5: #{ngcf_conv.1} parent=0 // pred_fallthru
    _
  // Predicated region
  $region6: #{ngcf_conv.1} parent=0 // pred_check
    _
  $region7: #{ngcf_conv.1} parent=0 // pred_check_branch
    %15 = sbr.rel (0) target = $region9
  $region8: #{ngcf_conv.1} parent=0 // pred_region
    _
  $region9: #{ngcf_conv.1} parent=0 // pred_fallthru
    _
  // Predicated region
  $region10: #{ngcf_conv.1} parent=0 // pred_check
    _
  $region11: #{ngcf_conv.1} parent=0 // pred_check_branch
    %17 = sbr.rel (0) target = $region13
  $region12: #{ngcf_conv.1} parent=0 // pred_region
    _
  $region13: #{ngcf_conv.1} parent=0 // pred_fallthru
    _
  // Predicated region
  $region14: #{ngcf_conv.1} parent=0 // pred_check
    _
  $region15: #{ngcf_conv.1} parent=0 // pred_check_branch
    %19 = sbr.rel (0) target = $region17
  $region16: #{ngcf_conv.1} parent=0 // pred_region
    _
  $region17: #{ngcf_conv.1} parent=0 // pred_fallthru
    _
  // Predicated region
  $region18: #{ngcf_conv.1} parent=0 // pred_check
    _
  $region19: #{ngcf_conv.1} parent=0 // pred_check_branch
    %21 = sbr.rel (0) target = $region21
  $region20: #{ngcf_conv.1} parent=0 // pred_region
    _
  $region21: #{ngcf_conv.1} parent=0 // pred_fallthru
    _
  // Predicated region
  $region22: #{ngcf_conv.1} parent=0 // pred_check
    _
  $region23: #{ngcf_conv.1} parent=0 // pred_check_branch
    %23 = sbr.rel (0) target = $region25
  $region24: #{ngcf_conv.1} parent=0 // pred_region
    _
  $region25: #{ngcf_conv.1} parent=0 // pred_fallthru
    _
  // Predicated region
  $region26: #{ngcf_conv.1} parent=0 // pred_check
    _
  $region27: #{ngcf_conv.1} parent=0 // pred_check_branch
    %25 = sbr.rel (0) target = $region29
  $region28: #{ngcf_conv.1} parent=0 // pred_region
    _
  $region29: #{ngcf_conv.1} parent=0 // pred_fallthru
    _
  %p26 = scmp.eq.s32.totalorder 0, 0
  // Predicated region
  $region30: #{ngcf_conv.1} parent=0 // pred_check
    %p27 = pneg %p26
  $region31: #{ngcf_conv.1} parent=0 // pred_check_branch
    %29 = sbr.rel (%p27) target = $region33
  $region32: #{ngcf_conv.1} parent=0 // pred_region
    %30 = vst [vmem:[#allocation2] sm:$0xff] 0.0
    %31 = vst [vmem:[#allocation2 + $0x8] sm:$0xff] 0.0
    %32 = vst [vmem:[#allocation2 + $0x10] sm:$0xff] 0.0
    %33 = vst [vmem:[#allocation2 + $0x18] sm:$0xff] 0.0
    %34 = vst [vmem:[#allocation2 + $0x20] sm:$0xff] 0.0
    %35 = vst [vmem:[#allocation2 + $0x28] sm:$0xff] 0.0
    %36 = vst [vmem:[#allocation2 + $0x30] sm:$0xff] 0.0
    %37 = vst [vmem:[#allocation2 + $0x38] sm:$0xff] 0.0
    %38 = vst [vmem:[#allocation2 + $0x40] sm:$0xff] 0.0
    %39 = vst [vmem:[#allocation2 + $0x48] sm:$0xff] 0.0
    %40 = vst [vmem:[#allocation2 + $0x50] sm:$0xff] 0.0
    %41 = vst [vmem:[#allocation2 + $0x58] sm:$0xff] 0.0
    %42 = vst [vmem:[#allocation2 + $0x60] sm:$0xff] 0.0
    %43 = vst [vmem:[#allocation2 + $0x68] sm:$0xff] 0.0
    %44 = vst [vmem:[#allocation2 + $0x70] sm:$0xff] 0.0
    %45 = vst [vmem:[#allocation2 + $0x78] sm:$0xff] 0.0
  $region33: #{ngcf_conv.1} parent=0 // pred_fallthru
    _
  %s46 = smul.u32 0, 128
  %s47 = sshra.s32 %s46, 3
  %s48 = sand.u32 %s46, 7
  %s49 = smul.addr %s47, 4
  %s50 = scalar_lea.vmem %s1, %s49
  %v51 = vld [vmem:[%s50] sm:$0xf]
  %v52 = vld [vmem:[%s50 + $0x4] sm:$0xf]
  %v53 = vld [vmem:[%s50 + $0x8] sm:$0xf]
  %v54 = vld [vmem:[%s50 + $0xc] sm:$0xf]
  %v55 = vld [vmem:[%s50 + $0x10] sm:$0xf]
  %v56 = vld [vmem:[%s50 + $0x14] sm:$0xf]
  %v57 = vld [vmem:[%s50 + $0x18] sm:$0xf]
  %v58 = vld [vmem:[%s50 + $0x1c] sm:$0xf]
  %v59 = vld [vmem:[%s50 + $0x20] sm:$0xf]
  %v60 = vld [vmem:[%s50 + $0x24] sm:$0xf]
  %v61 = vld [vmem:[%s50 + $0x28] sm:$0xf]
  %v62 = vld [vmem:[%s50 + $0x2c] sm:$0xf]
  %v63 = vld [vmem:[%s50 + $0x30] sm:$0xf]
  %v64 = vld [vmem:[%s50 + $0x34] sm:$0xf]
  %v65 = vld [vmem:[%s50 + $0x38] sm:$0xf]
  %v66 = vld [vmem:[%s50 + $0x3c] sm:$0xf]
  %v67 = vld [vmem:[#allocation2] sm:$0xff]
  %v68 = vld [vmem:[#allocation2 + $0x8] sm:$0xff]
  %v69 = vld [vmem:[#allocation2 + $0x10] sm:$0xff]
  %v70 = vld [vmem:[#allocation2 + $0x18] sm:$0xff]
  %v71 = vld [vmem:[#allocation2 + $0x20] sm:$0xff]
  %v72 = vld [vmem:[#allocation2 + $0x28] sm:$0xff]
  %v73 = vld [vmem:[#allocation2 + $0x30] sm:$0xff]
  %v74 = vld [vmem:[#allocation2 + $0x38] sm:$0xff]
  %v75 = vld [vmem:[#allocation2 + $0x40] sm:$0xff]
  %v76 = vld [vmem:[#allocation2 + $0x48] sm:$0xff]
  %v77 = vld [vmem:[#allocation2 + $0x50] sm:$0xff]
  %v78 = vld [vmem:[#allocation2 + $0x58] sm:$0xff]
  %v79 = vld [vmem:[#allocation2 + $0x60] sm:$0xff]
  %v80 = vld [vmem:[#allocation2 + $0x68] sm:$0xff]
  %v81 = vld [vmem:[#allocation2 + $0x70] sm:$0xff]
  %v82 = vld [vmem:[#allocation2 + $0x78] sm:$0xff]
  %v83 = vld [vmem:[%s0] sm:$0xf]
  %v84 = vld [vmem:[%s0 + $0x4] sm:$0xf]
  %v85 = vld [vmem:[%s0 + $0x8] sm:$0xf]
  %v86 = vld [vmem:[%s0 + $0xc] sm:$0xf]
  %v87 = vld [vmem:[%s0 + $0x10] sm:$0xf]
  %v88 = vld [vmem:[%s0 + $0x14] sm:$0xf]
  %v89 = vld [vmem:[%s0 + $0x18] sm:$0xf]
  %v90 = vld [vmem:[%s0 + $0x1c] sm:$0xf]
  %v91 = vld [vmem:[%s0 + $0x20] sm:$0xf]
  %v92 = vld [vmem:[%s0 + $0x24] sm:$0xf]
  %v93 = vld [vmem:[%s0 + $0x28] sm:$0xf]
  %v94 = vld [vmem:[%s0 + $0x2c] sm:$0xf]
  %v95 = vld [vmem:[%s0 + $0x30] sm:$0xf]
  %v96 = vld [vmem:[%s0 + $0x34] sm:$0xf]
  %v97 = vld [vmem:[%s0 + $0x38] sm:$0xf]
  %v98 = vld [vmem:[%s0 + $0x3c] sm:$0xf]
  %v115 = vunpack.c.l.b16 %v83
  %v116 = vunpack.c.l.b16 %v84
  %v117 = vunpack.c.l.b16 %v85
  %v118 = vunpack.c.l.b16 %v86
  %v119 = vunpack.c.l.b16 %v87
  %v120 = vunpack.c.l.b16 %v88
  %v121 = vunpack.c.l.b16 %v89
  %v122 = vunpack.c.l.b16 %v90
  %v123 = vunpack.c.l.b16 %v91
  %v124 = vunpack.c.l.b16 %v92
  %v125 = vunpack.c.l.b16 %v93
  %v126 = vunpack.c.l.b16 %v94
  %v127 = vunpack.c.l.b16 %v95
  %v128 = vunpack.c.l.b16 %v96
  %v129 = vunpack.c.l.b16 %v97
  %v130 = vunpack.c.l.b16 %v98
  %v131 = vpack.c.b16 %v116, %v115
  %v132 = vpack.c.b16 %v118, %v117
  %v133 = vpack.c.b16 %v120, %v119
  %v134 = vpack.c.b16 %v122, %v121
  %v135 = vpack.c.b16 %v124, %v123
  %v136 = vpack.c.b16 %v126, %v125
  %v137 = vpack.c.b16 %v128, %v127
  %v138 = vpack.c.b16 %v130, %v129
  %v163 = vunpack.c.l.b16 %v51
  %v164 = vunpack.c.l.b16 %v52
  %v165 = vunpack.c.l.b16 %v53
  %v166 = vunpack.c.l.b16 %v54
  %v167 = vunpack.c.l.b16 %v55
  %v168 = vunpack.c.l.b16 %v56
  %v169 = vunpack.c.l.b16 %v57
  %v170 = vunpack.c.l.b16 %v58
  %v171 = vunpack.c.l.b16 %v59
  %v172 = vunpack.c.l.b16 %v60
  %v173 = vunpack.c.l.b16 %v61
  %v174 = vunpack.c.l.b16 %v62
  %v175 = vunpack.c.l.b16 %v63
  %v176 = vunpack.c.l.b16 %v64
  %v177 = vunpack.c.l.b16 %v65
  %v178 = vunpack.c.l.b16 %v66
  %v179 = vpack.c.b16 %v164, %v163
  %v180 = vpack.c.b16 %v166, %v165
  %v181 = vpack.c.b16 %v168, %v167
  %v182 = vpack.c.b16 %v170, %v169
  %v183 = vpack.c.b16 %v172, %v171
  %v184 = vpack.c.b16 %v174, %v173
  %v185 = vpack.c.b16 %v176, %v175
  %v186 = vpack.c.b16 %v178, %v177
  %195 = vmatpush.bf16.msra.mxu0 %v186
  %196 = vmatpush.bf16.msra.mxu0 %v185
  %197 = vmatpush.bf16.msra.mxu0 %v184
  %198 = vmatpush.bf16.msra.mxu0 %v183
  %199 = vmatpush.bf16.msra.mxu0 %v182
  %200 = vmatpush.bf16.msra.mxu0 %v181
  %201 = vmatpush.bf16.msra.mxu0 %v180
  %202 = vmatpush.bf16.msra.mxu0 %v179
  %203 = vmatmul.bf16.gmra.mxu0 %v131
  %v204 = vpop.f32.mrf.mxu0
  %v205 = vadd.f32 0.0, %v204
  %v206 = vpop.f32.mrf.mxu0
  %v207 = vadd.f32 0.0, %v206
  %208 = vmatmul.bf16.gmra.mxu0 %v132
  %v209 = vpop.f32.mrf.mxu0
  %v210 = vadd.f32 0.0, %v209
  %v211 = vpop.f32.mrf.mxu0
  %v212 = vadd.f32 0.0, %v211
  %213 = vmatmul.bf16.gmra.mxu0 %v133
  %v214 = vpop.f32.mrf.mxu0
  %v215 = vadd.f32 0.0, %v214
  %v216 = vpop.f32.mrf.mxu0
  %v217 = vadd.f32 0.0, %v216
  %218 = vmatmul.bf16.gmra.mxu0 %v134
  %v219 = vpop.f32.mrf.mxu0
  %v220 = vadd.f32 0.0, %v219
  %v221 = vpop.f32.mrf.mxu0
  %v222 = vadd.f32 0.0, %v221
  %223 = vmatmul.bf16.gmra.mxu0 %v135
  %v224 = vpop.f32.mrf.mxu0
  %v225 = vadd.f32 0.0, %v224
  %v226 = vpop.f32.mrf.mxu0
  %v227 = vadd.f32 0.0, %v226
  %228 = vmatmul.bf16.gmra.mxu0 %v136
  %v229 = vpop.f32.mrf.mxu0
  %v230 = vadd.f32 0.0, %v229
  %v231 = vpop.f32.mrf.mxu0
  %v232 = vadd.f32 0.0, %v231
  %233 = vmatmul.bf16.gmra.mxu0 %v137
  %v234 = vpop.f32.mrf.mxu0
  %v235 = vadd.f32 0.0, %v234
  %v236 = vpop.f32.mrf.mxu0
  %v237 = vadd.f32 0.0, %v236
  %238 = vmatmul.bf16.gmra.mxu0 %v138
  %v239 = vpop.f32.mrf.mxu0
  %v240 = vadd.f32 0.0, %v239
  %v241 = vpop.f32.mrf.mxu0
  %v242 = vadd.f32 0.0, %v241
  %243 = vdwg.mxu0
  %v244 = vadd.f32 %v67, %v205
  %v245 = vadd.f32 %v68, %v207
  %v246 = vadd.f32 %v69, %v210
  %v247 = vadd.f32 %v70, %v212
  %v248 = vadd.f32 %v71, %v215
  %v249 = vadd.f32 %v72, %v217
  %v250 = vadd.f32 %v73, %v220
  %v251 = vadd.f32 %v74, %v222
  %v252 = vadd.f32 %v75, %v225
  %v253 = vadd.f32 %v76, %v227
  %v254 = vadd.f32 %v77, %v230
  %v255 = vadd.f32 %v78, %v232
  %v256 = vadd.f32 %v79, %v235
  %v257 = vadd.f32 %v80, %v237
  %v258 = vadd.f32 %v81, %v240
  %v259 = vadd.f32 %v82, %v242
  %260 = vst [vmem:[#allocation2] sm:$0xff] %v244
  %261 = vst [vmem:[#allocation2 + $0x8] sm:$0xff] %v245
  %262 = vst [vmem:[#allocation2 + $0x10] sm:$0xff] %v246
  %263 = vst [vmem:[#allocation2 + $0x18] sm:$0xff] %v247
  %264 = vst [vmem:[#allocation2 + $0x20] sm:$0xff] %v248
  %265 = vst [vmem:[#allocation2 + $0x28] sm:$0xff] %v249
  %266 = vst [vmem:[#allocation2 + $0x30] sm:$0xff] %v250
  %267 = vst [vmem:[#allocation2 + $0x38] sm:$0xff] %v251
  %268 = vst [vmem:[#allocation2 + $0x40] sm:$0xff] %v252
  %269 = vst [vmem:[#allocation2 + $0x48] sm:$0xff] %v253
  %270 = vst [vmem:[#allocation2 + $0x50] sm:$0xff] %v254
  %271 = vst [vmem:[#allocation2 + $0x58] sm:$0xff] %v255
  %272 = vst [vmem:[#allocation2 + $0x60] sm:$0xff] %v256
  %273 = vst [vmem:[#allocation2 + $0x68] sm:$0xff] %v257
  %274 = vst [vmem:[#allocation2 + $0x70] sm:$0xff] %v258
  %275 = vst [vmem:[#allocation2 + $0x78] sm:$0xff] %v259
  // Predicated region
  $region34: #{ngcf_conv.1} parent=0 // pred_check
    %p276 = pneg %p26
  $region35: #{ngcf_conv.1} parent=0 // pred_check_branch
    %278 = sbr.rel (%p276) target = $region37
  $region36: #{ngcf_conv.1} parent=0 // pred_region
    %v279 = vld [vmem:[#allocation2] sm:$0xff]
    %v280 = vld [vmem:[#allocation2 + $0x8] sm:$0xff]
    %v281 = vld [vmem:[#allocation2 + $0x10] sm:$0xff]
    %v282 = vld [vmem:[#allocation2 + $0x18] sm:$0xff]
    %v283 = vld [vmem:[#allocation2 + $0x20] sm:$0xff]
    %v284 = vld [vmem:[#allocation2 + $0x28] sm:$0xff]
    %v285 = vld [vmem:[#allocation2 + $0x30] sm:$0xff]
    %v286 = vld [vmem:[#allocation2 + $0x38] sm:$0xff]
    %v287 = vld [vmem:[#allocation2 + $0x40] sm:$0xff]
    %v288 = vld [vmem:[#allocation2 + $0x48] sm:$0xff]
    %v289 = vld [vmem:[#allocation2 + $0x50] sm:$0xff]
    %v290 = vld [vmem:[#allocation2 + $0x58] sm:$0xff]
    %v291 = vld [vmem:[#allocation2 + $0x60] sm:$0xff]
    %v292 = vld [vmem:[#allocation2 + $0x68] sm:$0xff]
    %v293 = vld [vmem:[#allocation2 + $0x70] sm:$0xff]
    %v294 = vld [vmem:[#allocation2 + $0x78] sm:$0xff]
    %v295 = vld [vmem:[%s2] sm:$0xff]
    %v296 = vld [vmem:[%s2 + $0x8] sm:$0xff]
    %v297 = vld [vmem:[%s2 + $0x10] sm:$0xff]
    %v298 = vld [vmem:[%s2 + $0x18] sm:$0xff]
    %v299 = vld [vmem:[%s2 + $0x20] sm:$0xff]
    %v300 = vld [vmem:[%s2 + $0x28] sm:$0xff]
    %v301 = vld [vmem:[%s2 + $0x30] sm:$0xff]
    %v302 = vld [vmem:[%s2 + $0x38] sm:$0xff]
    %v303 = vld [vmem:[%s2 + $0x40] sm:$0xff]
    %v304 = vld [vmem:[%s2 + $0x48] sm:$0xff]
    %v305 = vld [vmem:[%s2 + $0x50] sm:$0xff]
    %v306 = vld [vmem:[%s2 + $0x58] sm:$0xff]
    %v307 = vld [vmem:[%s2 + $0x60] sm:$0xff]
    %v308 = vld [vmem:[%s2 + $0x68] sm:$0xff]
    %v309 = vld [vmem:[%s2 + $0x70] sm:$0xff]
    %v310 = vld [vmem:[%s2 + $0x78] sm:$0xff]
    %v311 = vadd.f32 %v279, %v295
    %v312 = vadd.f32 %v280, %v296
    %v313 = vadd.f32 %v281, %v297
    %v314 = vadd.f32 %v282, %v298
    %v315 = vadd.f32 %v283, %v299
    %v316 = vadd.f32 %v284, %v300
    %v317 = vadd.f32 %v285, %v301
    %v318 = vadd.f32 %v286, %v302
    %v319 = vadd.f32 %v287, %v303
    %v320 = vadd.f32 %v288, %v304
    %v321 = vadd.f32 %v289, %v305
    %v322 = vadd.f32 %v290, %v306
    %v323 = vadd.f32 %v291, %v307
    %v324 = vadd.f32 %v292, %v308
    %v325 = vadd.f32 %v293, %v309
    %v326 = vadd.f32 %v294, %v310
    %v327 = vld [vmem:[%s3] sm:$0xff]
    %v328 = vld [vmem:[%s3 + $0x8] sm:$0xff]
    %v329 = vld [vmem:[%s3 + $0x10] sm:$0xff]
    %v330 = vld [vmem:[%s3 + $0x18] sm:$0xff]
    %v331 = vld [vmem:[%s3 + $0x20] sm:$0xff]
    %v332 = vld [vmem:[%s3 + $0x28] sm:$0xff]
    %v333 = vld [vmem:[%s3 + $0x30] sm:$0xff]
    %v334 = vld [vmem:[%s3 + $0x38] sm:$0xff]
    %v335 = vld [vmem:[%s3 + $0x40] sm:$0xff]
    %v336 = vld [vmem:[%s3 + $0x48] sm:$0xff]
    %v337 = vld [vmem:[%s3 + $0x50] sm:$0xff]
    %v338 = vld [vmem:[%s3 + $0x58] sm:$0xff]
    %v339 = vld [vmem:[%s3 + $0x60] sm:$0xff]
    %v340 = vld [vmem:[%s3 + $0x68] sm:$0xff]
    %v341 = vld [vmem:[%s3 + $0x70] sm:$0xff]
    %v342 = vld [vmem:[%s3 + $0x78] sm:$0xff]
    %v343 = vld [vmem:[%s4] sm:$0x1]
    %v345 = vperm.slane %v343, 0
    %347 = vmatpush.msra.mxu0 %v342
    %348 = vmatpush.msra.mxu0 %v341
    %349 = vmatpush.msra.mxu0 %v340
    %350 = vmatpush.msra.mxu0 %v339
    %351 = vmatpush.msra.mxu0 %v338
    %352 = vmatpush.msra.mxu0 %v337
    %353 = vmatpush.msra.mxu0 %v336
    %354 = vmatpush.msra.mxu0 %v335
    %355 = vmatpush.msra.mxu0 %v334
    %356 = vmatpush.msra.mxu0 %v333
    %357 = vmatpush.msra.mxu0 %v332
    %358 = vmatpush.msra.mxu0 %v331
    %359 = vmatpush.msra.mxu0 %v330
    %360 = vmatpush.msra.mxu0 %v329
    %361 = vmatpush.msra.mxu0 %v328
    %362 = vmatpush.msra.mxu0 %v327
    %363 = vmatmul.f32.gmra.mxu0 %v311
    %v364 = vpop.f32.mrf.mxu0
    %v365 = vadd.f32 %v345, %v364
    %366 = vmatmul.f32.gmra.mxu0 %v312
    %v367 = vpop.f32.mrf.mxu0
    %v368 = vadd.f32 %v345, %v367
    %369 = vmatmul.f32.gmra.mxu0 %v313
    %v370 = vpop.f32.mrf.mxu0
    %v371 = vadd.f32 %v345, %v370
    %372 = vmatmul.f32.gmra.mxu0 %v314
    %v373 = vpop.f32.mrf.mxu0
    %v374 = vadd.f32 %v345, %v373
    %375 = vmatmul.f32.gmra.mxu0 %v315
    %v376 = vpop.f32.mrf.mxu0
    %v377 = vadd.f32 %v345, %v376
    %378 = vmatmul.f32.gmra.mxu0 %v316
    %v379 = vpop.f32.mrf.mxu0
    %v380 = vadd.f32 %v345, %v379
    %381 = vmatmul.f32.gmra.mxu0 %v317
    %v382 = vpop.f32.mrf.mxu0
    %v383 = vadd.f32 %v345, %v382
    %384 = vmatmul.f32.gmra.mxu0 %v318
    %v385 = vpop.f32.mrf.mxu0
    %v386 = vadd.f32 %v345, %v385
    %387 = vmatmul.f32.gmra.mxu0 %v319
    %v388 = vpop.f32.mrf.mxu0
    %v389 = vadd.f32 %v345, %v388
    %390 = vmatmul.f32.gmra.mxu0 %v320
    %v391 = vpop.f32.mrf.mxu0
    %v392 = vadd.f32 %v345, %v391
    %393 = vmatmul.f32.gmra.mxu0 %v321
    %v394 = vpop.f32.mrf.mxu0
    %v395 = vadd.f32 %v345, %v394
    %396 = vmatmul.f32.gmra.mxu0 %v322
    %v397 = vpop.f32.mrf.mxu0
    %v398 = vadd.f32 %v345, %v397
    %399 = vmatmul.f32.gmra.mxu0 %v323
    %v400 = vpop.f32.mrf.mxu0
    %v401 = vadd.f32 %v345, %v400
    %402 = vmatmul.f32.gmra.mxu0 %v324
    %v403 = vpop.f32.mrf.mxu0
    %v404 = vadd.f32 %v345, %v403
    %405 = vmatmul.f32.gmra.mxu0 %v325
    %v406 = vpop.f32.mrf.mxu0
    %v407 = vadd.f32 %v345, %v406
    %408 = vmatmul.f32.gmra.mxu0 %v326
    %v409 = vpop.f32.mrf.mxu0
    %v410 = vadd.f32 %v345, %v409
    %411 = vdwg.mxu0
    %vm412 = vcmp.ge.f32.partialorder %v365, 0.0
    %vm413 = vcmp.ge.f32.partialorder %v368, 0.0
    %vm414 = vcmp.ge.f32.partialorder %v371, 0.0
    %vm415 = vcmp.ge.f32.partialorder %v374, 0.0
    %vm416 = vcmp.ge.f32.partialorder %v377, 0.0
    %vm417 = vcmp.ge.f32.partialorder %v380, 0.0
    %vm418 = vcmp.ge.f32.partialorder %v383, 0.0
    %vm419 = vcmp.ge.f32.partialorder %v386, 0.0
    %vm420 = vcmp.ge.f32.partialorder %v389, 0.0
    %vm421 = vcmp.ge.f32.partialorder %v392, 0.0
    %vm422 = vcmp.ge.f32.partialorder %v395, 0.0
    %vm423 = vcmp.ge.f32.partialorder %v398, 0.0
    %vm424 = vcmp.ge.f32.partialorder %v401, 0.0
    %vm425 = vcmp.ge.f32.partialorder %v404, 0.0
    %vm426 = vcmp.ge.f32.partialorder %v407, 0.0
    %vm427 = vcmp.ge.f32.partialorder %v410, 0.0
    %v428 = vmul.f32 %v365, 0.01
    %v429 = vmul.f32 %v368, 0.01
    %v430 = vmul.f32 %v371, 0.01
    %v431 = vmul.f32 %v374, 0.01
    %v432 = vmul.f32 %v377, 0.01
    %v433 = vmul.f32 %v380, 0.01
    %v434 = vmul.f32 %v383, 0.01
    %v435 = vmul.f32 %v386, 0.01
    %v436 = vmul.f32 %v389, 0.01
    %v437 = vmul.f32 %v392, 0.01
    %v438 = vmul.f32 %v395, 0.01
    %v439 = vmul.f32 %v398, 0.01
    %v440 = vmul.f32 %v401, 0.01
    %v441 = vmul.f32 %v404, 0.01
    %v442 = vmul.f32 %v407, 0.01
    %v443 = vmul.f32 %v410, 0.01
    %v444 = vsel %vm412, %v365, %v428
    %v445 = vsel %vm413, %v368, %v429
    %v446 = vsel %vm414, %v371, %v430
    %v447 = vsel %vm415, %v374, %v431
    %v448 = vsel %vm416, %v377, %v432
    %v449 = vsel %vm417, %v380, %v433
    %v450 = vsel %vm418, %v383, %v434
    %v451 = vsel %vm419, %v386, %v435
    %v452 = vsel %vm420, %v389, %v436
    %v453 = vsel %vm421, %v392, %v437
    %v454 = vsel %vm422, %v395, %v438
    %v455 = vsel %vm423, %v398, %v439
    %v456 = vsel %vm424, %v401, %v440
    %v457 = vsel %vm425, %v404, %v441
    %v458 = vsel %vm426, %v407, %v442
    %v459 = vsel %vm427, %v410, %v443
    %v460 = vmul.f32 %v279, %v295
    %v461 = vmul.f32 %v280, %v296
    %v462 = vmul.f32 %v281, %v297
    %v463 = vmul.f32 %v282, %v298
    %v464 = vmul.f32 %v283, %v299
    %v465 = vmul.f32 %v284, %v300
    %v466 = vmul.f32 %v285, %v301
    %v467 = vmul.f32 %v286, %v302
    %v468 = vmul.f32 %v287, %v303
    %v469 = vmul.f32 %v288, %v304
    %v470 = vmul.f32 %v289, %v305
    %v471 = vmul.f32 %v290, %v306
    %v472 = vmul.f32 %v291, %v307
    %v473 = vmul.f32 %v292, %v308
    %v474 = vmul.f32 %v293, %v309
    %v475 = vmul.f32 %v294, %v310
    %v476 = vld [vmem:[%s5] sm:$0xff]
    %v477 = vld [vmem:[%s5 + $0x8] sm:$0xff]
    %v478 = vld [vmem:[%s5 + $0x10] sm:$0xff]
    %v479 = vld [vmem:[%s5 + $0x18] sm:$0xff]
    %v480 = vld [vmem:[%s5 + $0x20] sm:$0xff]
    %v481 = vld [vmem:[%s5 + $0x28] sm:$0xff]
    %v482 = vld [vmem:[%s5 + $0x30] sm:$0xff]
    %v483 = vld [vmem:[%s5 + $0x38] sm:$0xff]
    %v484 = vld [vmem:[%s5 + $0x40] sm:$0xff]
    %v485 = vld [vmem:[%s5 + $0x48] sm:$0xff]
    %v486 = vld [vmem:[%s5 + $0x50] sm:$0xff]
    %v487 = vld [vmem:[%s5 + $0x58] sm:$0xff]
    %v488 = vld [vmem:[%s5 + $0x60] sm:$0xff]
    %v489 = vld [vmem:[%s5 + $0x68] sm:$0xff]
    %v490 = vld [vmem:[%s5 + $0x70] sm:$0xff]
    %v491 = vld [vmem:[%s5 + $0x78] sm:$0xff]
    %v492 = vld [vmem:[%s6] sm:$0x1]
    %v494 = vperm.slane %v492, 0
    %496 = vmatpush.msra.mxu0 %v491
    %497 = vmatpush.msra.mxu0 %v490
    %498 = vmatpush.msra.mxu0 %v489
    %499 = vmatpush.msra.mxu0 %v488
    %500 = vmatpush.msra.mxu0 %v487
    %501 = vmatpush.msra.mxu0 %v486
    %502 = vmatpush.msra.mxu0 %v485
    %503 = vmatpush.msra.mxu0 %v484
    %504 = vmatpush.msra.mxu0 %v483
    %505 = vmatpush.msra.mxu0 %v482
    %506 = vmatpush.msra.mxu0 %v481
    %507 = vmatpush.msra.mxu0 %v480
    %508 = vmatpush.msra.mxu0 %v479
    %509 = vmatpush.msra.mxu0 %v478
    %510 = vmatpush.msra.mxu0 %v477
    %511 = vmatpush.msra.mxu0 %v476
    %512 = vmatmul.f32.gmra.mxu0 %v460
    %v513 = vpop.f32.mrf.mxu0
    %v514 = vadd.f32 %v494, %v513
    %515 = vmatmul.f32.gmra.mxu0 %v461
    %v516 = vpop.f32.mrf.mxu0
    %v517 = vadd.f32 %v494, %v516
    %518 = vmatmul.f32.gmra.mxu0 %v462
    %v519 = vpop.f32.mrf.mxu0
    %v520 = vadd.f32 %v494, %v519
    %521 = vmatmul.f32.gmra.mxu0 %v463
    %v522 = vpop.f32.mrf.mxu0
    %v523 = vadd.f32 %v494, %v522
    %524 = vmatmul.f32.gmra.mxu0 %v464
    %v525 = vpop.f32.mrf.mxu0
    %v526 = vadd.f32 %v494, %v525
    %527 = vmatmul.f32.gmra.mxu0 %v465
    %v528 = vpop.f32.mrf.mxu0
    %v529 = vadd.f32 %v494, %v528
    %530 = vmatmul.f32.gmra.mxu0 %v466
    %v531 = vpop.f32.mrf.mxu0
    %v532 = vadd.f32 %v494, %v531
    %533 = vmatmul.f32.gmra.mxu0 %v467
    %v534 = vpop.f32.mrf.mxu0
    %v535 = vadd.f32 %v494, %v534
    %536 = vmatmul.f32.gmra.mxu0 %v468
    %v537 = vpop.f32.mrf.mxu0
    %v538 = vadd.f32 %v494, %v537
    %539 = vmatmul.f32.gmra.mxu0 %v469
    %v540 = vpop.f32.mrf.mxu0
    %v541 = vadd.f32 %v494, %v540
    %542 = vmatmul.f32.gmra.mxu0 %v470
    %v543 = vpop.f32.mrf.mxu0
    %v544 = vadd.f32 %v494, %v543
    %545 = vmatmul.f32.gmra.mxu0 %v471
    %v546 = vpop.f32.mrf.mxu0
    %v547 = vadd.f32 %v494, %v546
    %548 = vmatmul.f32.gmra.mxu0 %v472
    %v549 = vpop.f32.mrf.mxu0
    %v550 = vadd.f32 %v494, %v549
    %551 = vmatmul.f32.gmra.mxu0 %v473
    %v552 = vpop.f32.mrf.mxu0
    %v553 = vadd.f32 %v494, %v552
    %554 = vmatmul.f32.gmra.mxu0 %v474
    %v555 = vpop.f32.mrf.mxu0
    %v556 = vadd.f32 %v494, %v555
    %557 = vmatmul.f32.gmra.mxu0 %v475
    %v558 = vpop.f32.mrf.mxu0
    %v559 = vadd.f32 %v494, %v558
    %560 = vdwg.mxu0
    %vm561 = vcmp.ge.f32.partialorder %v514, 0.0
    %vm562 = vcmp.ge.f32.partialorder %v517, 0.0
    %vm563 = vcmp.ge.f32.partialorder %v520, 0.0
    %vm564 = vcmp.ge.f32.partialorder %v523, 0.0
    %vm565 = vcmp.ge.f32.partialorder %v526, 0.0
    %vm566 = vcmp.ge.f32.partialorder %v529, 0.0
    %vm567 = vcmp.ge.f32.partialorder %v532, 0.0
    %vm568 = vcmp.ge.f32.partialorder %v535, 0.0
    %vm569 = vcmp.ge.f32.partialorder %v538, 0.0
    %vm570 = vcmp.ge.f32.partialorder %v541, 0.0
    %vm571 = vcmp.ge.f32.partialorder %v544, 0.0
    %vm572 = vcmp.ge.f32.partialorder %v547, 0.0
    %vm573 = vcmp.ge.f32.partialorder %v550, 0.0
    %vm574 = vcmp.ge.f32.partialorder %v553, 0.0
    %vm575 = vcmp.ge.f32.partialorder %v556, 0.0
    %vm576 = vcmp.ge.f32.partialorder %v559, 0.0
    %v577 = vmul.f32 %v514, 0.01
    %v578 = vmul.f32 %v517, 0.01
    %v579 = vmul.f32 %v520, 0.01
    %v580 = vmul.f32 %v523, 0.01
    %v581 = vmul.f32 %v526, 0.01
    %v582 = vmul.f32 %v529, 0.01
    %v583 = vmul.f32 %v532, 0.01
    %v584 = vmul.f32 %v535, 0.01
    %v585 = vmul.f32 %v538, 0.01
    %v586 = vmul.f32 %v541, 0.01
    %v587 = vmul.f32 %v544, 0.01
    %v588 = vmul.f32 %v547, 0.01
    %v589 = vmul.f32 %v550, 0.01
    %v590 = vmul.f32 %v553, 0.01
    %v591 = vmul.f32 %v556, 0.01
    %v592 = vmul.f32 %v559, 0.01
    %v593 = vsel %vm561, %v514, %v577
    %v594 = vsel %vm562, %v517, %v578
    %v595 = vsel %vm563, %v520, %v579
    %v596 = vsel %vm564, %v523, %v580
    %v597 = vsel %vm565, %v526, %v581
    %v598 = vsel %vm566, %v529, %v582
    %v599 = vsel %vm567, %v532, %v583
    %v600 = vsel %vm568, %v535, %v584
    %v601 = vsel %vm569, %v538, %v585
    %v602 = vsel %vm570, %v541, %v586
    %v603 = vsel %vm571, %v544, %v587
    %v604 = vsel %vm572, %v547, %v588
    %v605 = vsel %vm573, %v550, %v589
    %v606 = vsel %vm574, %v553, %v590
    %v607 = vsel %vm575, %v556, %v591
    %v608 = vsel %vm576, %v559, %v592
    %v609 = vadd.f32 %v444, %v593
    %v610 = vadd.f32 %v445, %v594
    %v611 = vadd.f32 %v446, %v595
    %v612 = vadd.f32 %v447, %v596
    %v613 = vadd.f32 %v448, %v597
    %v614 = vadd.f32 %v449, %v598
    %v615 = vadd.f32 %v450, %v599
    %v616 = vadd.f32 %v451, %v600
    %v617 = vadd.f32 %v452, %v601
    %v618 = vadd.f32 %v453, %v602
    %v619 = vadd.f32 %v454, %v603
    %v620 = vadd.f32 %v455, %v604
    %v621 = vadd.f32 %v456, %v605
    %v622 = vadd.f32 %v457, %v606
    %v623 = vadd.f32 %v458, %v607
    %v624 = vadd.f32 %v459, %v608
    %v625 = vmul.f32 %v609, %v609
    %v626 = vmul.f32 %v610, %v610
    %v627 = vmul.f32 %v611, %v611
    %v628 = vmul.f32 %v612, %v612
    %v629 = vmul.f32 %v613, %v613
    %v630 = vmul.f32 %v614, %v614
    %v631 = vmul.f32 %v615, %v615
    %v632 = vmul.f32 %v616, %v616
    %v633 = vmul.f32 %v617, %v617
    %v634 = vmul.f32 %v618, %v618
    %v635 = vmul.f32 %v619, %v619
    %v636 = vmul.f32 %v620, %v620
    %v637 = vmul.f32 %v621, %v621
    %v638 = vmul.f32 %v622, %v622
    %v639 = vmul.f32 %v623, %v623
    %v640 = vmul.f32 %v624, %v624
    %641 = vadd.xlane.f32.xlu0 %v625
    %v642 = vpop.xlane.xlu0 %641
    %643 = vadd.xlane.f32.xlu0 %v626
    %v644 = vpop.xlane.xlu0 %643
    %645 = vadd.xlane.f32.xlu0 %v627
    %v646 = vpop.xlane.xlu0 %645
    %647 = vadd.xlane.f32.xlu0 %v628
    %v648 = vpop.xlane.xlu0 %647
    %649 = vadd.xlane.f32.xlu0 %v629
    %v650 = vpop.xlane.xlu0 %649
    %651 = vadd.xlane.f32.xlu0 %v630
    %v652 = vpop.xlane.xlu0 %651
    %653 = vadd.xlane.f32.xlu0 %v631
    %v654 = vpop.xlane.xlu0 %653
    %655 = vadd.xlane.f32.xlu0 %v632
    %v656 = vpop.xlane.xlu0 %655
    %657 = vadd.xlane.f32.xlu0 %v633
    %v658 = vpop.xlane.xlu0 %657
    %659 = vadd.xlane.f32.xlu0 %v634
    %v660 = vpop.xlane.xlu0 %659
    %661 = vadd.xlane.f32.xlu0 %v635
    %v662 = vpop.xlane.xlu0 %661
    %663 = vadd.xlane.f32.xlu0 %v636
    %v664 = vpop.xlane.xlu0 %663
    %665 = vadd.xlane.f32.xlu0 %v637
    %v666 = vpop.xlane.xlu0 %665
    %667 = vadd.xlane.f32.xlu0 %v638
    %v668 = vpop.xlane.xlu0 %667
    %669 = vadd.xlane.f32.xlu0 %v639
    %v670 = vpop.xlane.xlu0 %669
    %671 = vadd.xlane.f32.xlu0 %v640
    %v672 = vpop.xlane.xlu0 %671
    %v673 = vmax.f32 %v642, 1e-24
    %v674 = vmax.f32 %v644, 1e-24
    %v675 = vmax.f32 %v646, 1e-24
    %v676 = vmax.f32 %v648, 1e-24
    %v677 = vmax.f32 %v650, 1e-24
    %v678 = vmax.f32 %v652, 1e-24
    %v679 = vmax.f32 %v654, 1e-24
    %v680 = vmax.f32 %v656, 1e-24
    %v681 = vmax.f32 %v658, 1e-24
    %v682 = vmax.f32 %v660, 1e-24
    %v683 = vmax.f32 %v662, 1e-24
    %v684 = vmax.f32 %v664, 1e-24
    %v685 = vmax.f32 %v666, 1e-24
    %v686 = vmax.f32 %v668, 1e-24
    %v687 = vmax.f32 %v670, 1e-24
    %v688 = vmax.f32 %v672, 1e-24
    %v689 = vrsqrt.pop %v673
    %v690 = vmul.f32 %v689, %v673
    %v691 = vmul.f32 %v690, %v689
    %v692 = vmul.f32 0.5, %v691
    %v693 = vsub.f32 1.5, %v692
    %v694 = vmul.f32 %v689, %v693
    %vm695 = vweird.f32 %v673
    %vm696 = vweird.f32 %v689
    %vm697 = vmor %vm695, %vm696
    %v698 = vsel %vm697, %v689, %v694
    %v699 = vrsqrt.pop %v674
    %v700 = vmul.f32 %v699, %v674
    %v701 = vmul.f32 %v700, %v699
    %v702 = vmul.f32 0.5, %v701
    %v703 = vsub.f32 1.5, %v702
    %v704 = vmul.f32 %v699, %v703
    %vm705 = vweird.f32 %v674
    %vm706 = vweird.f32 %v699
    %vm707 = vmor %vm705, %vm706
    %v708 = vsel %vm707, %v699, %v704
    %v709 = vrsqrt.pop %v675
    %v710 = vmul.f32 %v709, %v675
    %v711 = vmul.f32 %v710, %v709
    %v712 = vmul.f32 0.5, %v711
    %v713 = vsub.f32 1.5, %v712
    %v714 = vmul.f32 %v709, %v713
    %vm715 = vweird.f32 %v675
    %vm716 = vweird.f32 %v709
    %vm717 = vmor %vm715, %vm716
    %v718 = vsel %vm717, %v709, %v714
    %v719 = vrsqrt.pop %v676
    %v720 = vmul.f32 %v719, %v676
    %v721 = vmul.f32 %v720, %v719
    %v722 = vmul.f32 0.5, %v721
    %v723 = vsub.f32 1.5, %v722
    %v724 = vmul.f32 %v719, %v723
    %vm725 = vweird.f32 %v676
    %vm726 = vweird.f32 %v719
    %vm727 = vmor %vm725, %vm726
    %v728 = vsel %vm727, %v719, %v724
    %v729 = vrsqrt.pop %v677
    %v730 = vmul.f32 %v729, %v677
    %v731 = vmul.f32 %v730, %v729
    %v732 = vmul.f32 0.5, %v731
    %v733 = vsub.f32 1.5, %v732
    %v734 = vmul.f32 %v729, %v733
    %vm735 = vweird.f32 %v677
    %vm736 = vweird.f32 %v729
    %vm737 = vmor %vm735, %vm736
    %v738 = vsel %vm737, %v729, %v734
    %v739 = vrsqrt.pop %v678
    %v740 = vmul.f32 %v739, %v678
    %v741 = vmul.f32 %v740, %v739
    %v742 = vmul.f32 0.5, %v741
    %v743 = vsub.f32 1.5, %v742
    %v744 = vmul.f32 %v739, %v743
    %vm745 = vweird.f32 %v678
    %vm746 = vweird.f32 %v739
    %vm747 = vmor %vm745, %vm746
    %v748 = vsel %vm747, %v739, %v744
    %v749 = vrsqrt.pop %v679
    %v750 = vmul.f32 %v749, %v679
    %v751 = vmul.f32 %v750, %v749
    %v752 = vmul.f32 0.5, %v751
    %v753 = vsub.f32 1.5, %v752
    %v754 = vmul.f32 %v749, %v753
    %vm755 = vweird.f32 %v679
    %vm756 = vweird.f32 %v749
    %vm757 = vmor %vm755, %vm756
    %v758 = vsel %vm757, %v749, %v754
    %v759 = vrsqrt.pop %v680
    %v760 = vmul.f32 %v759, %v680
    %v761 = vmul.f32 %v760, %v759
    %v762 = vmul.f32 0.5, %v761
    %v763 = vsub.f32 1.5, %v762
    %v764 = vmul.f32 %v759, %v763
    %vm765 = vweird.f32 %v680
    %vm766 = vweird.f32 %v759
    %vm767 = vmor %vm765, %vm766
    %v768 = vsel %vm767, %v759, %v764
    %v769 = vrsqrt.pop %v681
    %v770 = vmul.f32 %v769, %v681
    %v771 = vmul.f32 %v770, %v769
    %v772 = vmul.f32 0.5, %v771
    %v773 = vsub.f32 1.5, %v772
    %v774 = vmul.f32 %v769, %v773
    %vm775 = vweird.f32 %v681
    %vm776 = vweird.f32 %v769
    %vm777 = vmor %vm775, %vm776
    %v778 = vsel %vm777, %v769, %v774
    %v779 = vrsqrt.pop %v682
    %v780 = vmul.f32 %v779, %v682
    %v781 = vmul.f32 %v780, %v779
    %v782 = vmul.f32 0.5, %v781
    %v783 = vsub.f32 1.5, %v782
    %v784 = vmul.f32 %v779, %v783
    %vm785 = vweird.f32 %v682
    %vm786 = vweird.f32 %v779
    %vm787 = vmor %vm785, %vm786
    %v788 = vsel %vm787, %v779, %v784
    %v789 = vrsqrt.pop %v683
    %v790 = vmul.f32 %v789, %v683
    %v791 = vmul.f32 %v790, %v789
    %v792 = vmul.f32 0.5, %v791
    %v793 = vsub.f32 1.5, %v792
    %v794 = vmul.f32 %v789, %v793
    %vm795 = vweird.f32 %v683
    %vm796 = vweird.f32 %v789
    %vm797 = vmor %vm795, %vm796
    %v798 = vsel %vm797, %v789, %v794
    %v799 = vrsqrt.pop %v684
    %v800 = vmul.f32 %v799, %v684
    %v801 = vmul.f32 %v800, %v799
    %v802 = vmul.f32 0.5, %v801
    %v803 = vsub.f32 1.5, %v802
    %v804 = vmul.f32 %v799, %v803
    %vm805 = vweird.f32 %v684
    %vm806 = vweird.f32 %v799
    %vm807 = vmor %vm805, %vm806
    %v808 = vsel %vm807, %v799, %v804
    %v809 = vrsqrt.pop %v685
    %v810 = vmul.f32 %v809, %v685
    %v811 = vmul.f32 %v810, %v809
    %v812 = vmul.f32 0.5, %v811
    %v813 = vsub.f32 1.5, %v812
    %v814 = vmul.f32 %v809, %v813
    %vm815 = vweird.f32 %v685
    %vm816 = vweird.f32 %v809
    %vm817 = vmor %vm815, %vm816
    %v818 = vsel %vm817, %v809, %v814
    %v819 = vrsqrt.pop %v686
    %v820 = vmul.f32 %v819, %v686
    %v821 = vmul.f32 %v820, %v819
    %v822 = vmul.f32 0.5, %v821
    %v823 = vsub.f32 1.5, %v822
    %v824 = vmul.f32 %v819, %v823
    %vm825 = vweird.f32 %v686
    %vm826 = vweird.f32 %v819
    %vm827 = vmor %vm825, %vm826
    %v828 = vsel %vm827, %v819, %v824
    %v829 = vrsqrt.pop %v687
    %v830 = vmul.f32 %v829, %v687
    %v831 = vmul.f32 %v830, %v829
    %v832 = vmul.f32 0.5, %v831
    %v833 = vsub.f32 1.5, %v832
    %v834 = vmul.f32 %v829, %v833
    %vm835 = vweird.f32 %v687
    %vm836 = vweird.f32 %v829
    %vm837 = vmor %vm835, %vm836
    %v838 = vsel %vm837, %v829, %v834
    %v839 = vrsqrt.pop %v688
    %v840 = vmul.f32 %v839, %v688
    %v841 = vmul.f32 %v840, %v839
    %v842 = vmul.f32 0.5, %v841
    %v843 = vsub.f32 1.5, %v842
    %v844 = vmul.f32 %v839, %v843
    %vm845 = vweird.f32 %v688
    %vm846 = vweird.f32 %v839
    %vm847 = vmor %vm845, %vm846
    %v848 = vsel %vm847, %v839, %v844
    %v849 = vmul.f32 %v609, %v698
    %v850 = vmul.f32 %v610, %v708
    %v851 = vmul.f32 %v611, %v718
    %v852 = vmul.f32 %v612, %v728
    %v853 = vmul.f32 %v613, %v738
    %v854 = vmul.f32 %v614, %v748
    %v855 = vmul.f32 %v615, %v758
    %v856 = vmul.f32 %v616, %v768
    %v857 = vmul.f32 %v617, %v778
    %v858 = vmul.f32 %v618, %v788
    %v859 = vmul.f32 %v619, %v798
    %v860 = vmul.f32 %v620, %v808
    %v861 = vmul.f32 %v621, %v818
    %v862 = vmul.f32 %v622, %v828
    %v863 = vmul.f32 %v623, %v838
    %v864 = vmul.f32 %v624, %v848
    %865 = vst [vmem:[%s7] sm:$0xff] %v849
    %866 = vst [vmem:[%s7 + $0x8] sm:$0xff] %v850
    %867 = vst [vmem:[%s7 + $0x10] sm:$0xff] %v851
    %868 = vst [vmem:[%s7 + $0x18] sm:$0xff] %v852
    %869 = vst [vmem:[%s7 + $0x20] sm:$0xff] %v853
    %870 = vst [vmem:[%s7 + $0x28] sm:$0xff] %v854
    %871 = vst [vmem:[%s7 + $0x30] sm:$0xff] %v855
    %872 = vst [vmem:[%s7 + $0x38] sm:$0xff] %v856
    %873 = vst [vmem:[%s7 + $0x40] sm:$0xff] %v857
    %874 = vst [vmem:[%s7 + $0x48] sm:$0xff] %v858
    %875 = vst [vmem:[%s7 + $0x50] sm:$0xff] %v859
    %876 = vst [vmem:[%s7 + $0x58] sm:$0xff] %v860
    %877 = vst [vmem:[%s7 + $0x60] sm:$0xff] %v861
    %878 = vst [vmem:[%s7 + $0x68] sm:$0xff] %v862
    %879 = vst [vmem:[%s7 + $0x70] sm:$0xff] %v863
    %880 = vst [vmem:[%s7 + $0x78] sm:$0xff] %v864
  $region37: #{ngcf_conv.1} parent=0 // pred_fallthru
    _
  // Predicated region
  $region38: #{ngcf_conv.1} parent=0 // pred_check
    _
  $region39: #{ngcf_conv.1} parent=0 // pred_check_branch
    %882 = sbr.rel (0) target = $region41
  $region40: #{ngcf_conv.1} parent=0 // pred_region
    _
  $region41: #{ngcf_conv.1} parent=0 // pred_fallthru
    _
  // Predicated region
  $region42: #{ngcf_conv.1} parent=0 // pred_check
    _
  $region43: #{ngcf_conv.1} parent=0 // pred_check_branch
    %884 = sbr.rel (0) target = $region45
  $region44: #{ngcf_conv.1} parent=0 // pred_region
    _
  $region45: #{ngcf_conv.1} parent=0 // pred_fallthru
    _

</llo_original>
